<compile_context>
chip_gen: v6e
topology: v6e:2x2x1
jax: 0.10.0
libtpu: 0.0.40
codegen_flags: <defaults>
</compile_context>

<pallas_src>
from functools import partial

import jax
import jax.numpy as jnp
import numpy as np
from jax.experimental import pallas as pl
from jax.experimental.pallas import tpu as pltpu

NEG_SLOPE = 0.2


# ----------------------------- Pallas kernel --------------------------------
def _dis_conv_kernel(x_ref, w_ref, b_ref, o_ref, *, S, Q, OWp, neg_slope):
    # x_ref : (N, S, Wc, S*Cin)  one hc-slab = S padded input rows, W*Cin flat
    # w_ref : (QH, S*Q*S*Cin, Cout) full zero-padded weight, resident in VMEM
    # b_ref : (1, Cout)
    # o_ref : (N*OWp, Cout) f32  output row block, resident across the qh axis
    #         (block index constant over qh) -> doubles as the accumulator.
    qh = pl.program_id(1)
    nqh = pl.num_programs(1)
    n = x_ref.shape[0]
    scin = x_ref.shape[3]
    kstep = S * Q * scin

    # Fused im2col for S kernel rows x KW kernel cols: each (rh, q) pair is a
    # contiguous (S*Cin)-wide lane slice; concat along lanes builds the whole
    # (N*OWp, S*Q*S*Cin) LHS for a single MXU matmul.
    pieces = []
    for rh in range(S):
        for q in range(Q):
            pieces.append(x_ref[:, rh:rh + 1, q:q + OWp, :])   # (N,1,OWp,S*Cin)
    lhs = jnp.concatenate(pieces, axis=-1).reshape(n * OWp, kstep)
    contrib = jnp.dot(lhs, w_ref[qh], preferred_element_type=jnp.float32)

    @pl.when(qh == 0)
    def _():
        o_ref[...] = contrib                       # first visit: no zero-fill

    @pl.when(qh > 0)
    def _():
        o_ref[...] = o_ref[...] + contrib

    @pl.when(qh == nqh - 1)
    def _():
        y = o_ref[...] + b_ref[...]                # f32 epilogue (v5e-safe)
        o_ref[...] = jnp.maximum(y, neg_slope * y) # LeakyReLU, slope < 1


# ------------------------------- glue (JAX) ----------------------------------
def padding_amounts(h, w, kernel_size, stride, dilation_rate=1):
    """Replicates padding_function() pad amounts (extra pixel on top / left)."""
    nH = ((h + stride - 1) // stride - 1) * stride + (kernel_size - 1) * dilation_rate + 1
    nW = ((w + stride - 1) // stride - 1) * stride + (kernel_size - 1) * dilation_rate + 1
    top_bottom = nH - h
    left_right = nW - w
    if top_bottom > 0:
        bottom = top_bottom // 2
        top = top_bottom - bottom
    else:
        top = bottom = 0
    if left_right > 0:
        right = left_right // 2
        left = left_right - right
    else:
        left = right = 0
    return top, bottom, left, right


def spectral_normalize(weight, weight_u, eps=1e-12):
    """One power-iteration step exactly as Conv2D_Spectral_Norm.forward does."""
    cout = weight.shape[0]
    w_mat = weight.reshape(cout, -1)                       # (Cout, Cin*KH*KW)

    def l2norm(x):  # F.normalize(x, 2, dim=0, eps)
        return x / jnp.maximum(jnp.linalg.norm(x, axis=0, keepdims=True), eps)

    v = l2norm(w_mat.T @ weight_u)                         # (K, 1)
    u = l2norm(w_mat @ v)                                  # (Cout, 1)
    sigma = (u.T @ w_mat @ v)[0, 0]                        # scalar
    # TODO(synk): PyTorch persists the updated weight_u and divides weight in
    # place each forward; here the updated u is computed but not returned.
    return weight / sigma, u


def _round_up(x, m):
    return -(-x // m) * m


def _pick_vmem_limit(vmem_need):
    # Generation-aware ceiling: ~3/4 of physical VMEM (64 MiB/core on v7x,
    # 128 MiB on v5e/v6e), leaving headroom for compiler scratch / buffers.
    try:
        cap = int(getattr(pltpu.get_tpu_info(), "vmem_capacity_bytes",
                          128 * 1024 * 1024))
    except Exception:
        cap = 64 * 1024 * 1024
    ceiling = min((cap * 3) // 4, 100 * 1024 * 1024)
    return int(min(max(4 * vmem_need, 16 * 1024 * 1024), ceiling))


def dis_conv_forward(x_nchw, weight, bias, weight_u, kernel_size, stride,
                     compute_dtype=jnp.bfloat16):
    """Dis_Conv forward.  bf16 streaming is the default (MXU accumulation and
    the epilogue are f32); pass compute_dtype=jnp.float32 only for debugging."""
    N, Cin, H, W = x_nchw.shape
    Cout = weight.shape[0]
    KH = KW = kernel_size
    S = stride

    # spectral-normalized effective weight (tiny matvecs -> plain JAX glue)
    w_sn, _u_new = spectral_normalize(weight, weight_u)

    # padding_function semantics
    top, bottom, left, right = padding_amounts(H, W, kernel_size, stride)
    Hp, Wp = H + top + bottom, W + left + right
    OH = (Hp - KH) // S + 1
    OW = (Wp - KW) // S + 1

    Q = -(-KW // S)              # ceil(KW/S): width phase slices per kernel row
    QH = -(-KH // S)             # ceil(KH/S): reduction steps per output row
    OWp = _round_up(OW, 8)       # align M so sublane slices / collapses are free
    Wc = OWp + Q - 1
    Hc = OH + QH - 1
    Wpad, Hpad = Wc * S, Hc * S

    # NHWC + zero pad, then *view-only* reshapes (no relayout pass in HBM):
    # flatten (W, Cin) so each kernel-column phase is a contiguous lane slice,
    # and split H by the stride so each grid step grabs S kernel rows at once.
    x = jnp.transpose(x_nchw, (0, 2, 3, 1)).astype(compute_dtype)          # NHWC
    x = jnp.pad(x, ((0, 0), (top, Hpad - H - top), (left, Wpad - W - left), (0, 0)))
    xv = x.reshape(N, Hc, S, Wc, S * Cin)

    # weight -> (QH, S*Q*S*Cin, Cout), zero-padded so kh>=KH / kw>=KW taps vanish
    KHp, KWp = QH * S, Q * S
    Kstep = S * Q * S * Cin
    w_pad = jnp.pad(w_sn, ((0, 0), (0, 0), (0, KHp - KH), (0, KWp - KW)))
    w_mat = (jnp.transpose(w_pad, (2, 3, 1, 0))           # (KHp, KWp, Cin, Cout)
             .reshape(QH, S, Q, S, Cin, Cout)             # (qh, rh, q, sw, c, co)
             .reshape(QH, Kstep, Cout)
             .astype(compute_dtype))
    b_row = bias.reshape(1, Cout).astype(jnp.float32)

    kernel = partial(_dis_conv_kernel, S=S, Q=Q, OWp=OWp, neg_slope=NEG_SLOPE)

    # VMEM budget / cost estimate (advisory)
    itemsize = np.dtype(compute_dtype).itemsize
    in_blk = N * S * Wc * S * Cin * itemsize
    w_bytes = QH * Kstep * Cout * itemsize
    out_blk = N * OWp * Cout * 4
    lhs_bytes = N * OWp * Kstep * itemsize
    vmem_need = 2 * in_blk + w_bytes + 2 * out_blk + lhs_bytes + Cout * 4
    vmem_limit = _pick_vmem_limit(vmem_need)
    flops = 2 * N * OH * OWp * KHp * KWp * Cin * Cout
    bytes_accessed = OH * QH * in_blk + w_bytes + OH * out_blk + Cout * 4

    out = pl.pallas_call(
        kernel,
        out_shape=jax.ShapeDtypeStruct((OH, N * OWp, Cout), jnp.float32),
        grid=(OH, QH),
        in_specs=[
            # one hc-slab (S padded input rows) per step; block size 1 on hc so
            # the block index oh+qh is an element index (overlapping windows)
            pl.BlockSpec((N, None, S, Wc, S * Cin),
                         lambda oh, qh: (0, oh + qh, 0, 0, 0)),
            # full weight, block index constant -> DMA'd once, resident in VMEM
            pl.BlockSpec((QH, Kstep, Cout), lambda oh, qh: (0, 0, 0)),
            pl.BlockSpec((1, Cout), lambda oh, qh: (0, 0)),
        ],
        # block index constant over qh -> o_ref is the resident f32 accumulator
        out_specs=pl.BlockSpec((None, N * OWp, Cout), lambda oh, qh: (oh, 0, 0)),
        compiler_params=pltpu.CompilerParams(
            dimension_semantics=("parallel", "arbitrary"),
            vmem_limit_bytes=vmem_limit,
        ),
        cost_estimate=pl.CostEstimate(
            flops=flops, transcendentals=0, bytes_accessed=bytes_accessed),
    )(xv, w_mat, b_row)

    # TODO(synk): for Cout<128 layers a lane-dense (1, N*OWp*Cout) store would
    # avoid masked vst, but needs an in-kernel sublane->lane reshape; skipped
    # to keep lowering robust (writeback is once per output row and small).
    # TODO(synk): a v5e-targeted rolling-row buffer (memory_space=pl.ANY +
    # circular VMEM scratch + DMA sems) would cut input refetch from ~KH/S x
    # to ~1x; not implemented here.
    out = out.reshape(OH, N, OWp, Cout)[:, :, :OW, :]      # drop OW align pad
    return jnp.transpose(out, (1, 3, 0, 2))                # back to NCHW


# pure-JAX reference for a sanity check
def _reference_forward(x, weight, bias, weight_u, kernel_size, stride):
    w_sn, _ = spectral_normalize(weight, weight_u)
    top, bottom, left, right = padding_amounts(x.shape[2], x.shape[3], kernel_size, stride)
    xp = jnp.pad(x, ((0, 0), (0, 0), (top, bottom), (left, right)))
    y = jax.lax.conv_general_dilated(
        xp, w_sn, (stride, stride), "VALID",
        dimension_numbers=("NCHW", "OIHW", "NCHW"))
    y = y + bias.reshape(1, -1, 1, 1)
    return jnp.where(y >= 0, y, NEG_SLOPE * y)


if __name__ == "__main__":
    key = jax.random.PRNGKey(0)
    k_x, k_w, k_b, k_u = jax.random.split(key, 4)

    # Dis_Conv(input_cnum=4, output_cnum=8, kernel_size=5, stride=2)
    N, Cin, H, W = 2, 4, 16, 16
    Cout, kernel_size, stride = 8, 5, 2

    x = jax.random.normal(k_x, (N, Cin, H, W), dtype=jnp.float32)
    weight = 0.1 * jax.random.normal(k_w, (Cout, Cin, kernel_size, kernel_size), dtype=jnp.float32)
    bias = 0.1 * jax.random.normal(k_b, (Cout,), dtype=jnp.float32)
    weight_u = jax.random.normal(k_u, (Cout, 1), dtype=jnp.float32)  # trunc_normal buffer (deterministic init)

    ref = _reference_forward(x, weight, bias, weight_u, kernel_size, stride)

    # exact-ish f32 debug path (tight tolerance)
    fwd_f32 = jax.jit(partial(dis_conv_forward, kernel_size=kernel_size, stride=stride,
                              compute_dtype=jnp.float32))
    out_f32 = jax.block_until_ready(fwd_f32(x, weight, bias, weight_u))
    np.testing.assert_allclose(np.asarray(out_f32), np.asarray(ref), rtol=1e-4, atol=1e-4)

    # default bf16 streaming path with f32 accumulation (loose tolerance)
    fwd_bf16 = jax.jit(partial(dis_conv_forward, kernel_size=kernel_size, stride=stride))
    out_bf16 = jax.block_until_ready(fwd_bf16(x, weight, bias, weight_u))
    np.testing.assert_allclose(np.asarray(out_bf16), np.asarray(ref), rtol=3e-2, atol=3e-2)

    assert out_f32.shape == (N, Cout, (H + stride - 1) // stride, (W + stride - 1) // stride)
    print("KERNEL_OK")
</pallas_src>

<mosaic_0001>
module attributes {stable_mosaic.version = 11 : i64} {
  func.func @_dis_conv_kernel(%arg0: i32, %arg1: i32, %arg2: memref<2x1x2x10x8xf32, #tpu.memory_space<vmem>>, %arg3: memref<3x48x8xf32, #tpu.memory_space<vmem>>, %arg4: memref<1x8xf32, #tpu.memory_space<vmem>>, %arg5: memref<1x16x8xf32, #tpu.memory_space<vmem>>) attributes {dimension_semantics = [#tpu.dimension_semantics<parallel>, #tpu.dimension_semantics<arbitrary>], iteration_bounds = array<i64: 8, 3>, scalar_prefetch = 0 : i64, scratch_operands = 0 : i64, tpu.core_type = #tpu.core_type<tc>, window_params = [{transform_indices = @transform_0, window_bounds = array<i64: 2, 1, 2, 10, 8>}, {pipeline_mode = #tpu.pipeline_mode<synchronous>, transform_indices = @transform_1, window_bounds = array<i64: 3, 48, 8>}, {pipeline_mode = #tpu.pipeline_mode<synchronous>, transform_indices = @transform_2, window_bounds = array<i64: 1, 8>}, {transform_indices = @transform_3, window_bounds = array<i64: 1, 16, 8>}]} {
    %c0 = arith.constant 0 : index
    %c0_0 = arith.constant 0 : index
    %c0_1 = arith.constant 0 : index
    %c0_2 = arith.constant 0 : index
    %c0_3 = arith.constant 0 : index
    %0 = vector.load %arg2[%c0, %c0_0, %c0_1, %c0_2, %c0_3] : memref<2x1x2x10x8xf32, #tpu.memory_space<vmem>>, vector<2x1x1x8x8xf32>
    %1 = vector.shape_cast %0 : vector<2x1x1x8x8xf32> to vector<2x1x8x8xf32>
    %c0_4 = arith.constant 0 : index
    %c0_5 = arith.constant 0 : index
    %c0_6 = arith.constant 0 : index
    %c1 = arith.constant 1 : index
    %c0_7 = arith.constant 0 : index
    %2 = vector.load %arg2[%c0_4, %c0_5, %c0_6, %c1, %c0_7] : memref<2x1x2x10x8xf32, #tpu.memory_space<vmem>>, vector<2x1x1x8x8xf32>
    %3 = vector.shape_cast %2 : vector<2x1x1x8x8xf32> to vector<2x1x8x8xf32>
    %c0_8 = arith.constant 0 : index
    %c0_9 = arith.constant 0 : index
    %c0_10 = arith.constant 0 : index
    %c2 = arith.constant 2 : index
    %c0_11 = arith.constant 0 : index
    %4 = vector.load %arg2[%c0_8, %c0_9, %c0_10, %c2, %c0_11] : memref<2x1x2x10x8xf32, #tpu.memory_space<vmem>>, vector<2x1x1x8x8xf32>
    %5 = vector.shape_cast %4 : vector<2x1x1x8x8xf32> to vector<2x1x8x8xf32>
    %c0_12 = arith.constant 0 : index
    %c0_13 = arith.constant 0 : index
    %c1_14 = arith.constant 1 : index
    %c0_15 = arith.constant 0 : index
    %c0_16 = arith.constant 0 : index
    %6 = vector.load %arg2[%c0_12, %c0_13, %c1_14, %c0_15, %c0_16] : memref<2x1x2x10x8xf32, #tpu.memory_space<vmem>>, vector<2x1x1x8x8xf32>
    %7 = vector.shape_cast %6 : vector<2x1x1x8x8xf32> to vector<2x1x8x8xf32>
    %c0_17 = arith.constant 0 : index
    %c0_18 = arith.constant 0 : index
    %c1_19 = arith.constant 1 : index
    %c1_20 = arith.constant 1 : index
    %c0_21 = arith.constant 0 : index
    %8 = vector.load %arg2[%c0_17, %c0_18, %c1_19, %c1_20, %c0_21] : memref<2x1x2x10x8xf32, #tpu.memory_space<vmem>>, vector<2x1x1x8x8xf32>
    %9 = vector.shape_cast %8 : vector<2x1x1x8x8xf32> to vector<2x1x8x8xf32>
    %c0_22 = arith.constant 0 : index
    %c0_23 = arith.constant 0 : index
    %c1_24 = arith.constant 1 : index
    %c2_25 = arith.constant 2 : index
    %c0_26 = arith.constant 0 : index
    %10 = vector.load %arg2[%c0_22, %c0_23, %c1_24, %c2_25, %c0_26] : memref<2x1x2x10x8xf32, #tpu.memory_space<vmem>>, vector<2x1x1x8x8xf32>
    %11 = vector.shape_cast %10 : vector<2x1x1x8x8xf32> to vector<2x1x8x8xf32>
    %12 = tpu.concatenate %1, %3, %5, %7, %9, %11 in 3 : vector<2x1x8x8xf32>, vector<2x1x8x8xf32>, vector<2x1x8x8xf32>, vector<2x1x8x8xf32>, vector<2x1x8x8xf32>, vector<2x1x8x8xf32> -> vector<2x1x8x48xf32>
    %13 = vector.shape_cast %12 : vector<2x1x8x48xf32> to vector<16x48xf32>
    %14 = arith.index_cast %arg1 : i32 to index
    %c0_27 = arith.constant 0 : index
    %c0_28 = arith.constant 0 : index
    %15 = vector.load %arg3[%14, %c0_27, %c0_28] : memref<3x48x8xf32, #tpu.memory_space<vmem>>, vector<1x48x8xf32>
    %16 = vector.shape_cast %15 : vector<1x48x8xf32> to vector<48x8xf32>
    %cst = arith.constant dense<0.000000e+00> : vector<16x8xf32>
    %17 = tpu.matmul %13, %16, %cst {dimension_numbers = #tpu.dot_dimension_numbers<[1], [0], [0], [1], [0, 0, 1, 1], [], []>} : vector<16x48xf32>, vector<48x8xf32>, vector<16x8xf32> -> vector<16x8xf32>
    %c0_i32 = arith.constant 0 : i32
    %18 = arith.cmpi eq, %arg1, %c0_i32 : i32
    %19 = arith.extui %18 : i1 to i32
    %c0_i32_29 = arith.constant 0 : i32
    %20 = arith.cmpi ne, %19, %c0_i32_29 : i32
    scf.if %20 {
      %c0_33 = arith.constant 0 : index
      %c0_34 = arith.constant 0 : index
      %c0_35 = arith.constant 0 : index
      %27 = vector.load %arg5[%c0_33, %c0_34, %c0_35] : memref<1x16x8xf32, #tpu.memory_space<vmem>>, vector<1x16x8xf32>
      %28 = vector.shape_cast %27 : vector<1x16x8xf32> to vector<16x8xf32>
      %29 = vector.shape_cast %17 : vector<16x8xf32> to vector<1x16x8xf32>
      tpu.vector_store %arg5[%c0_33, %c0_34, %c0_35], %29 {strides = array<i32>} : memref<1x16x8xf32, #tpu.memory_space<vmem>>, vector<1x16x8xf32>,
    } else {
    }
    %c0_i32_30 = arith.constant 0 : i32
    %21 = arith.cmpi sgt, %arg1, %c0_i32_30 : i32
    %22 = arith.extui %21 : i1 to i32
    %c0_i32_31 = arith.constant 0 : i32
    %23 = arith.cmpi ne, %22, %c0_i32_31 : i32
    scf.if %23 {
      %c0_33 = arith.constant 0 : index
      %c0_34 = arith.constant 0 : index
      %c0_35 = arith.constant 0 : index
      %27 = vector.load %arg5[%c0_33, %c0_34, %c0_35] : memref<1x16x8xf32, #tpu.memory_space<vmem>>, vector<1x16x8xf32>
      %28 = vector.shape_cast %27 : vector<1x16x8xf32> to vector<16x8xf32>
      %29 = arith.addf %28, %17 : vector<16x8xf32>
      %c0_36 = arith.constant 0 : index
      %c0_37 = arith.constant 0 : index
      %c0_38 = arith.constant 0 : index
      %30 = vector.load %arg5[%c0_36, %c0_37, %c0_38] : memref<1x16x8xf32, #tpu.memory_space<vmem>>, vector<1x16x8xf32>
      %31 = vector.shape_cast %30 : vector<1x16x8xf32> to vector<16x8xf32>
      %32 = vector.shape_cast %29 : vector<16x8xf32> to vector<1x16x8xf32>
      tpu.vector_store %arg5[%c0_36, %c0_37, %c0_38], %32 {strides = array<i32>} : memref<1x16x8xf32, #tpu.memory_space<vmem>>, vector<1x16x8xf32>,
    } else {
    }
    %c2_i32 = arith.constant 2 : i32
    %24 = arith.cmpi eq, %arg1, %c2_i32 : i32
    %25 = arith.extui %24 : i1 to i32
    %c0_i32_32 = arith.constant 0 : i32
    %26 = arith.cmpi ne, %25, %c0_i32_32 : i32
    scf.if %26 {
      %c0_33 = arith.constant 0 : index
      %c0_34 = arith.constant 0 : index
      %c0_35 = arith.constant 0 : index
      %27 = vector.load %arg5[%c0_33, %c0_34, %c0_35] : memref<1x16x8xf32, #tpu.memory_space<vmem>>, vector<1x16x8xf32>
      %28 = vector.shape_cast %27 : vector<1x16x8xf32> to vector<16x8xf32>
      %c0_36 = arith.constant 0 : index
      %c0_37 = arith.constant 0 : index
      %29 = vector.load %arg4[%c0_36, %c0_37] : memref<1x8xf32, #tpu.memory_space<vmem>>, vector<1x8xf32>
      %30 = vector.broadcast %29 : vector<1x8xf32> to vector<16x8xf32>
      %31 = arith.addf %28, %30 : vector<16x8xf32>
      %cst_38 = arith.constant 2.000000e-01 : f32
      %32 = vector.broadcast %cst_38 : f32 to vector<16x8xf32>
      %33 = arith.mulf %32, %31 : vector<16x8xf32>
      %34 = arith.maximumf %31, %33 : vector<16x8xf32>
      %c0_39 = arith.constant 0 : index
      %c0_40 = arith.constant 0 : index
      %c0_41 = arith.constant 0 : index
      %35 = vector.load %arg5[%c0_39, %c0_40, %c0_41] : memref<1x16x8xf32, #tpu.memory_space<vmem>>, vector<1x16x8xf32>
      %36 = vector.shape_cast %35 : vector<1x16x8xf32> to vector<16x8xf32>
      %37 = vector.shape_cast %34 : vector<16x8xf32> to vector<1x16x8xf32>
      tpu.vector_store %arg5[%c0_39, %c0_40, %c0_41], %37 {strides = array<i32>} : memref<1x16x8xf32, #tpu.memory_space<vmem>>, vector<1x16x8xf32>,
    } else {
    }
    return
  }
  func.func @transform_0(%arg0: i32, %arg1: i32) -> (i32, i32, i32, i32, i32) {
    %0 = arith.addi %arg0, %arg1 : i32
    %c0_i32 = arith.constant 0 : i32
    %c0_i32_0 = arith.constant 0 : i32
    %c0_i32_1 = arith.constant 0 : i32
    %c0_i32_2 = arith.constant 0 : i32
    %c0_i32_3 = arith.constant 0 : i32
    return %c0_i32, %0, %c0_i32_0, %c0_i32_1, %c0_i32_2 : i32, i32, i32, i32, i32
  }
  func.func @transform_1(%arg0: i32, %arg1: i32) -> (i32, i32, i32) {
    %c0_i32 = arith.constant 0 : i32
    %c0_i32_0 = arith.constant 0 : i32
    %c0_i32_1 = arith.constant 0 : i32
    %c0_i32_2 = arith.constant 0 : i32
    return %c0_i32, %c0_i32_0, %c0_i32_1 : i32, i32, i32
  }
  func.func @transform_2(%arg0: i32, %arg1: i32) -> (i32, i32) {
    %c0_i32 = arith.constant 0 : i32
    %c0_i32_0 = arith.constant 0 : i32
    %c0_i32_1 = arith.constant 0 : i32
    return %c0_i32, %c0_i32_0 : i32, i32
  }
  func.func @transform_3(%arg0: i32, %arg1: i32) -> (i32, i32, i32) {
    %c0_i32 = arith.constant 0 : i32
    %c0_i32_0 = arith.constant 0 : i32
    %c0_i32_1 = arith.constant 0 : i32
    return %arg0, %c0_i32, %c0_i32_0 : i32, i32, i32
  }
}

</mosaic_0001>

<llo_original>
// kernel: dis_conv_forward.1
$region0: #{dis_conv_forward.1}
  #allocation0 [shape = 'u32[]', space=smem, size = 0x4, offset = 0x4, fixed_abs, tag = 'smem constant byte address 0x4 - core index']
  #allocation1 [shape = 'u32[144,128]{1,0:T(1,128)}', space=vmem, size = 0x12000, scoped, tag = 'internal scratch']
  %s0 = inlined_call_operand.vmem [shape: f32[2,10,2,10,8], index: 0, kind: input, shape index: {}]
  %s1 = inlined_call_operand.vmem [shape: f32[3,48,8], index: 1, kind: input, shape index: {}]
  %s2 = inlined_call_operand.vmem [shape: f32[1,8], index: 2, kind: input, shape index: {}]
  %s3 = inlined_call_operand.vmem [shape: f32[8,16,8], index: 3, kind: output, shape index: {}]
  %s4 = sld [smem:[#allocation0]]
  $region95: #{dis_conv_forward.1} parent=0
    _
  %s6 = ssub.s32 1, %s4
  %s7 = scalar_select 0, %s6, %s4
  $region1: #{dis_conv_forward.1} parent=0
    #allocation2 [shape = 'u8[65536]{0}', space=vmem, size = 0x10000, scoped, tag = 'input window, operand 0']
    loop: start=0, step=1, limit=26
    $region2: #{dis_conv_forward.1} parent=1 // loop_pre_header
      _
    $region3: #{dis_conv_forward.1} parent=1 // loop_header
      %s9 = sphi 0, %s13
      %p10 = scmp.ge.s32.totalorder %s9, 26
      %s16 = sphi 0, %s28
      %s17 = sphi 0, %s24
      %s18 = sphi 0, %s16
      %s19 = sphi 0, %s17
      %s20 = sphi 0, %s18
      %s21 = sphi 0, %s19
      %s33 = sphi 0, %s35
      %s36 = sphi 0, %s33
      %s37 = sphi 0, %s36
      %s53 = sphi 0, %s37
      %s57 = sphi 0, %s57
      %s59 = sphi 0, %s57
      %s60 = sphi 0, %s59
      %s74 = sphi 0, %s60
      %s78 = sphi 0, %s78
      %s80 = sphi 0, %s78
      %s81 = sphi 0, %s80
      %s95 = sphi 0, %s81
      %s101 = sphi 0, %s103
      %s104 = sphi 0, %s101
      %s105 = sphi 0, %s104
      %s121 = sphi 0, %s105
    $region4: #{dis_conv_forward.1} parent=1 // loop_header_branch
      %12 = sbr.rel (%p10) target = $region8
    $region5: #{dis_conv_forward.1} parent=1 // loop_body
      %s14 = ssub.s32 %s9, 1
      %s15 = ssub.s32 %s9, 2
      %s22 = sadd.s32 1, %s17
      %p23 = scmp.ge.s32.totalorder %s22, 3
      %s24 = scalar_select %p23, 0, %s22
      %s25 = sadd.s32 1, %s16
      %s26 = scalar_select %p23, %s25, %s16
      %p27 = scmp.ge.s32.totalorder %s26, 8
      %s28 = scalar_select %p27, 0, %s26
      %s29 = sadd.s32 %s16, %s17
      %s30 = sadd.s32 %s28, %s24
      %s31 = ssub.s32 %s29, %s30
      %p32 = scmp.eq.s32.totalorder %s31, 0
      %s34 = sadd.s32 %s33, 1
      %s35 = scalar_select %p32, %s33, %s34
      %p38 = pneg %p32
      %p39 = scmp.eq.s32.totalorder %s9, 23
      %p40 = por %p38, %p39
      %p41 = scmp.ne.s32.totalorder %s33, %s36
      %p42 = scmp.eq.s32.totalorder %s9, 0
      %p43 = por %p41, %p42
      %p44 = scmp.ne.s32.totalorder %s33, %s36
      %p45 = scmp.eq.s32.totalorder %s14, 23
      %p46 = por %p44, %p45
      %p47 = scmp.ne.s32.totalorder %s36, %s37
      %p48 = scmp.eq.s32.totalorder %s14, 0
      %p49 = por %p47, %p48
      %p50 = scmp.ne.s32.totalorder %s36, %s37
      %p51 = scmp.eq.s32.totalorder %s15, 23
      %p52 = por %p50, %p51
      %p54 = scmp.ne.s32.totalorder %s37, %s53
      %p55 = scmp.eq.s32.totalorder %s15, 0
      %p56 = por %p54, %p55
      %s58 = sadd.s32 %s57, 1
      %p61 = scmp.eq.s32.totalorder %s9, 23
      %p62 = scmp.ne.s32.totalorder %s57, %s59
      %p63 = scmp.eq.s32.totalorder %s9, 0
      %p64 = por %p62, %p63
      %p65 = scmp.ne.s32.totalorder %s57, %s59
      %p66 = scmp.eq.s32.totalorder %s14, 23
      %p67 = por %p65, %p66
      %p68 = scmp.ne.s32.totalorder %s59, %s60
      %p69 = scmp.eq.s32.totalorder %s14, 0
      %p70 = por %p68, %p69
      %p71 = scmp.ne.s32.totalorder %s59, %s60
      %p72 = scmp.eq.s32.totalorder %s15, 23
      %p73 = por %p71, %p72
      %p75 = scmp.ne.s32.totalorder %s60, %s74
      %p76 = scmp.eq.s32.totalorder %s15, 0
      %p77 = por %p75, %p76
      %s79 = sadd.s32 %s78, 1
      %p82 = scmp.eq.s32.totalorder %s9, 23
      %p83 = scmp.ne.s32.totalorder %s78, %s80
      %p84 = scmp.eq.s32.totalorder %s9, 0
      %p85 = por %p83, %p84
      %p86 = scmp.ne.s32.totalorder %s78, %s80
      %p87 = scmp.eq.s32.totalorder %s14, 23
      %p88 = por %p86, %p87
      %p89 = scmp.ne.s32.totalorder %s80, %s81
      %p90 = scmp.eq.s32.totalorder %s14, 0
      %p91 = por %p89, %p90
      %p92 = scmp.ne.s32.totalorder %s80, %s81
      %p93 = scmp.eq.s32.totalorder %s15, 23
      %p94 = por %p92, %p93
      %p96 = scmp.ne.s32.totalorder %s81, %s95
      %p97 = scmp.eq.s32.totalorder %s15, 0
      %p98 = por %p96, %p97
      %s99 = ssub.s32 %s16, %s28
      %p100 = scmp.eq.s32.totalorder %s99, 0
      %s102 = sadd.s32 %s101, 1
      %s103 = scalar_select %p100, %s101, %s102
      %p106 = pneg %p100
      %p107 = scmp.eq.s32.totalorder %s9, 23
      %p108 = por %p106, %p107
      %p109 = scmp.ne.s32.totalorder %s101, %s104
      %p110 = scmp.eq.s32.totalorder %s9, 0
      %p111 = por %p109, %p110
      %p112 = scmp.ne.s32.totalorder %s101, %s104
      %p113 = scmp.eq.s32.totalorder %s14, 23
      %p114 = por %p112, %p113
      %p115 = scmp.ne.s32.totalorder %s104, %s105
      %p116 = scmp.eq.s32.totalorder %s14, 0
      %p117 = por %p115, %p116
      %p118 = scmp.ne.s32.totalorder %s104, %s105
      %p119 = scmp.eq.s32.totalorder %s15, 23
      %p120 = por %p118, %p119
      %p122 = scmp.ne.s32.totalorder %s105, %s121
      %p123 = scmp.eq.s32.totalorder %s15, 0
      %p124 = por %p122, %p123
      %p125 = scmp.le.s32.totalorder 1, %s9
      %p126 = scmp.lt.s32.totalorder %s9, 25
      %p127 = pnand %p125, %p126
      %p128 = pneg %p127
      // Predicated region
      $region9: #{dis_conv_forward.1} parent=5 // pred_check
        _
      $region10: #{dis_conv_forward.1} parent=5 // pred_check_branch
        %130 = sbr.rel (%p127) target = $region12
      $region11: #{dis_conv_forward.1} parent=5 // pred_region
        %s131 = ssub.s32 %s9, 1
        // Predicated region
        $region13: #{dis_conv_forward.1} parent=11 // pred_check
          %p132 = pneg %p70
        $region14: #{dis_conv_forward.1} parent=11 // pred_check_branch
          %134 = sbr.rel (%p132) target = $region16
        $region15: #{dis_conv_forward.1} parent=11 // pred_region
          _
        $region16: #{dis_conv_forward.1} parent=11 // pred_fallthru
          _
        // Predicated region
        $region17: #{dis_conv_forward.1} parent=11 // pred_check
          %p135 = pneg %p91
        $region18: #{dis_conv_forward.1} parent=11 // pred_check_branch
          %137 = sbr.rel (%p135) target = $region20
        $region19: #{dis_conv_forward.1} parent=11 // pred_region
          _
        $region20: #{dis_conv_forward.1} parent=11 // pred_fallthru
          _
      $region12: #{dis_conv_forward.1} parent=5 // pred_fallthru
        _
      %p138 = scmp.lt.s32.totalorder %s9, 24
      // Predicated region
      $region21: #{dis_conv_forward.1} parent=5 // pred_check
        %p139 = pneg %p138
      $region22: #{dis_conv_forward.1} parent=5 // pred_check_branch
        %141 = sbr.rel (%p139) target = $region24
      $region23: #{dis_conv_forward.1} parent=5 // pred_region
        // Predicated region
        $region25: #{dis_conv_forward.1} parent=23 // pred_check
          %p142 = pneg %p43
        $region26: #{dis_conv_forward.1} parent=23 // pred_check_branch
          %144 = sbr.rel (%p142) target = $region28
        $region27: #{dis_conv_forward.1} parent=23 // pred_region
          %s145 = sand.u32 %s33, 1
          %s146 = sand.u32 %s33, 1
          %s147 = smul.addr %s146, 64
          %s148 = scalar_lea.vmem [#allocation2], %s147
          %s149 = sadd.s32 %s16, %s17
          %s150 = smul.addr %s149, 4
          %s151 = smul.addr %s150, 8
          %s152 = scalar_lea.vmem %s0, %s151
          // Predicated region
          $region29: #{dis_conv_forward.1} parent=27 // pred_check
            _
          $region30: #{dis_conv_forward.1} parent=27 // pred_check_branch
            %154 = sbr.rel (0) target = $region32
          $region31: #{dis_conv_forward.1} parent=27 // pred_region
            // Predicated region
            $region33: #{dis_conv_forward.1} parent=31 // pred_check
              _
            $region34: #{dis_conv_forward.1} parent=31 // pred_check_branch
              %156 = sbr.rel (0) target = $region36
            $region35: #{dis_conv_forward.1} parent=31 // pred_region
              // Predicated region
              $region48: #{dis_conv_forward.1} parent=35 // pred_check
                _
              $region49: #{dis_conv_forward.1} parent=35 // pred_check_branch
                %186 = sbr.rel (0) target = $region51
              $region50: #{dis_conv_forward.1} parent=35 // pred_region
                loop: start=0, step=1, limit=1
                $region52: #{dis_conv_forward.1} parent=50 // loop_pre_header
                  _
                $region53: #{dis_conv_forward.1} parent=50 // loop_header
                  %s188 = sphi 0, %s192
                  %p189 = scmp.ge.s32.totalorder %s188, 1
                  %s193 = sphi %s152, %s152
                  %s194 = sphi %s148, %s148
                $region54: #{dis_conv_forward.1} parent=50 // loop_header_branch
                  %191 = sbr.rel (%p189) target = $region58
                $region55: #{dis_conv_forward.1} parent=50 // loop_body
                  %v195 = vld [vmem:[%s193] sm:$0xff]
                  %196 = vst [vmem:[%s194] sm:$0xff] %v195
                  %v197 = vld [vmem:[%s193 + $0x8] sm:$0xff]
                  %198 = vst [vmem:[%s194 + $0x8] sm:$0xff] %v197
                  %v199 = vld [vmem:[%s193 + $0x10] sm:$0xff]
                  %200 = vst [vmem:[%s194 + $0x10] sm:$0xff] %v199
                  %v201 = vld [vmem:[%s193 + $0x18] sm:$0xff]
                  %202 = vst [vmem:[%s194 + $0x18] sm:$0xff] %v201
                  %v203 = vld [vmem:[%s193 + $0x140] sm:$0xff]
                  %204 = vst [vmem:[%s194 + $0x20] sm:$0xff] %v203
                  %v205 = vld [vmem:[%s193 + $0x148] sm:$0xff]
                  %206 = vst [vmem:[%s194 + $0x28] sm:$0xff] %v205
                  %v207 = vld [vmem:[%s193 + $0x150] sm:$0xff]
                  %208 = vst [vmem:[%s194 + $0x30] sm:$0xff] %v207
                  %v209 = vld [vmem:[%s193 + $0x158] sm:$0xff]
                  %210 = vst [vmem:[%s194 + $0x38] sm:$0xff] %v209
                $region56: #{dis_conv_forward.1} parent=50 // loop_footer
                  %s192 = sadd.s32 1, %s188
                $region57: #{dis_conv_forward.1} parent=50 // loop_footer_branch
                  %187 = sbr.rel target = $region53
                $region58: #{dis_conv_forward.1} parent=50 // loop_exit
                  _
              $region51: #{dis_conv_forward.1} parent=35 // pred_fallthru
                _
              // Predicated region
              $region59: #{dis_conv_forward.1} parent=35 // pred_check
                _
              $region60: #{dis_conv_forward.1} parent=35 // pred_check_branch
                %212 = sbr.rel target = $region62
              $region61: #{dis_conv_forward.1} parent=35 // pred_region
                _
              $region62: #{dis_conv_forward.1} parent=35 // pred_fallthru
                _
            $region36: #{dis_conv_forward.1} parent=31 // pred_fallthru
              _
            // Predicated region
            $region37: #{dis_conv_forward.1} parent=31 // pred_check
              _
            $region38: #{dis_conv_forward.1} parent=31 // pred_check_branch
              %158 = sbr.rel target = $region40
            $region39: #{dis_conv_forward.1} parent=31 // pred_region
              %s160 = ssub.s32 256, 1
              loop: start=0, step=1, limit=1
              $region41: #{dis_conv_forward.1} parent=39 // loop_pre_header
                _
              $region42: #{dis_conv_forward.1} parent=39 // loop_header
                %s162 = sphi 0, %s166
                %p163 = scmp.ge.s32.totalorder %s162, 1
                %s167 = sphi %s152, %s152
                %s168 = sphi %s148, %s148
              $region43: #{dis_conv_forward.1} parent=39 // loop_header_branch
                %165 = sbr.rel (%p163) target = $region47
              $region44: #{dis_conv_forward.1} parent=39 // loop_body
                %v169 = vld [vmem:[%s167] sm:%s160]
                %170 = vst [vmem:[%s168] sm:%s160] %v169
                %v171 = vld [vmem:[%s167 + $0x8] sm:%s160]
                %172 = vst [vmem:[%s168 + $0x8] sm:%s160] %v171
                %v173 = vld [vmem:[%s167 + $0x10] sm:%s160]
                %174 = vst [vmem:[%s168 + $0x10] sm:%s160] %v173
                %v175 = vld [vmem:[%s167 + $0x18] sm:%s160]
                %176 = vst [vmem:[%s168 + $0x18] sm:%s160] %v175
                %v177 = vld [vmem:[%s167 + $0x140] sm:%s160]
                %178 = vst [vmem:[%s168 + $0x20] sm:%s160] %v177
                %v179 = vld [vmem:[%s167 + $0x148] sm:%s160]
                %180 = vst [vmem:[%s168 + $0x28] sm:%s160] %v179
                %v181 = vld [vmem:[%s167 + $0x150] sm:%s160]
                %182 = vst [vmem:[%s168 + $0x30] sm:%s160] %v181
                %v183 = vld [vmem:[%s167 + $0x158] sm:%s160]
                %184 = vst [vmem:[%s168 + $0x38] sm:%s160] %v183
              $region45: #{dis_conv_forward.1} parent=39 // loop_footer
                %s166 = sadd.s32 1, %s162
              $region46: #{dis_conv_forward.1} parent=39 // loop_footer_branch
                %161 = sbr.rel target = $region42
              $region47: #{dis_conv_forward.1} parent=39 // loop_exit
                _
            $region40: #{dis_conv_forward.1} parent=31 // pred_fallthru
              _
          $region32: #{dis_conv_forward.1} parent=27 // pred_fallthru
            _
          %213 = vnop
        $region28: #{dis_conv_forward.1} parent=23 // pred_fallthru
          _
      $region24: #{dis_conv_forward.1} parent=5 // pred_fallthru
        _
      %p214 = scmp.le.s32.totalorder 1, %s9
      %p215 = scmp.lt.s32.totalorder %s9, 25
      %p216 = pnand %p214, %p215
      %p217 = pneg %p216
      // Predicated region
      $region63: #{dis_conv_forward.1} parent=5 // pred_check
        _
      $region64: #{dis_conv_forward.1} parent=5 // pred_check_branch
        %219 = sbr.rel (%p216) target = $region66
      $region65: #{dis_conv_forward.1} parent=5 // pred_region
        %s220 = ssub.s32 %s9, 1
        %s221 = sand.u32 %s36, 1
        %s222 = sand.u32 %s36, 1
        %s223 = smul.addr %s222, 64
        %s224 = scalar_lea.vmem [#allocation2], %s223
        // Predicated region
        $region67: #{dis_conv_forward.1} parent=65 // pred_check
          %p225 = pneg %p49
        $region68: #{dis_conv_forward.1} parent=65 // pred_check_branch
          %227 = sbr.rel (%p225) target = $region70
        $region69: #{dis_conv_forward.1} parent=65 // pred_region
          _
        $region70: #{dis_conv_forward.1} parent=65 // pred_fallthru
          _
        %s228 = sand.u32 %s36, 1
        %s229 = sand.u32 %s36, 1
        %s230 = smul.addr %s229, 64
        %s231 = scalar_lea.vmem [#allocation2], %s230
        %p232 = pneg %p49
        %p233 = pneg %p46
        %p234 = pneg %p70
        %p235 = pneg %p67
        %p236 = pneg %p91
        %p237 = pneg %p88
        %p238 = pneg %p117
        %p239 = pneg %p114
        %p240 = scmp.lt.s32.totalorder %s18, 7
        %s241 = scalar_select %p240, %s18, 7
        %s242 = smul.addr %s241, 2
        %s243 = smul.addr %s242, 8
        %s244 = scalar_lea.vmem %s3, %s243
        %s245 = sadd.s32 %s18, %s19
        %p246 = scmp.lt.s32.totalorder %s18, 7
        %s247 = scalar_select %p246, %s18, 7
        %s248 = smul.addr %s247, 2
        %s249 = smul.addr %s248, 8
        %s250 = scalar_lea.vmem %s3, %s249
        %v251 = vld [vmem:[%s224] sm:$0xff]
        %v252 = vld [vmem:[%s224 + $0x20] sm:$0xff]
        %v253 = vld [vmem:[%s224 + $0x1] sm:$0xff]
        %v254 = vld [vmem:[%s224 + $0x21] sm:$0xff]
        %v255 = vld [vmem:[%s224 + $0x2] sm:$0xff]
        %v256 = vld [vmem:[%s224 + $0x22] sm:$0xff]
        %s257 = scalar_lea.vmem %s224, 16 [#allocation2]
        %v258 = vld [vmem:[%s257] sm:$0xff]
        %v259 = vld [vmem:[%s257 + $0x20] sm:$0xff]
        %v260 = vld [vmem:[%s257 + $0x1] sm:$0xff]
        %v261 = vld [vmem:[%s257 + $0x21] sm:$0xff]
        %v262 = vld [vmem:[%s257 + $0x2] sm:$0xff]
        %v263 = vld [vmem:[%s257 + $0x22] sm:$0xff]
        %266 = vrot.lane.b32.xlu0 %v253, 8
        %v267 = vpop.permute.xlu0 %266
        %268 = vrot.lane.b32.xlu0 %v254, 8
        %v269 = vpop.permute.xlu0 %268
        %274 = vrot.lane.b32.xlu0 %v255, 16
        %v275 = vpop.permute.xlu0 %274
        %276 = vrot.lane.b32.xlu0 %v256, 16
        %v277 = vpop.permute.xlu0 %276
        %282 = vrot.lane.b32.xlu0 %v258, 24
        %v283 = vpop.permute.xlu0 %282
        %284 = vrot.lane.b32.xlu0 %v259, 24
        %v285 = vpop.permute.xlu0 %284
        %290 = vrot.lane.b32.xlu0 %v260, 32
        %v291 = vpop.permute.xlu0 %290
        %292 = vrot.lane.b32.xlu0 %v261, 32
        %v293 = vpop.permute.xlu0 %292
        %298 = vrot.lane.b32.xlu0 %v262, 40
        %v299 = vpop.permute.xlu0 %298
        %300 = vrot.lane.b32.xlu0 %v263, 40
        %v301 = vpop.permute.xlu0 %300
        %vm304 = vcmask 64512
        %v305 = vsel %vm304, %v251, %v267
        %v306 = vsel %vm304, %v252, %v269
        %vm307 = vcmask 130048
        %v308 = vsel %vm307, %v305, %v275
        %v309 = vsel %vm307, %v306, %v277
        %vm310 = vcmask 195584
        %v311 = vsel %vm310, %v308, %v283
        %v312 = vsel %vm310, %v309, %v285
        %vm313 = vcmask 261120
        %v314 = vsel %vm313, %v311, %v291
        %v315 = vsel %vm313, %v312, %v293
        %vm316 = vcmask 326656
        %v317 = vsel %vm316, %v314, %v299
        %v318 = vsel %vm316, %v315, %v301
        %s319 = smul.u32 %s19, 48
        %s320 = scalar_lea.vmem %s1, %s319
        %v321 = vld [vmem:[%s320] sm:$0xff]
        %v322 = vld [vmem:[%s320 + $0x8] sm:$0xff]
        %v323 = vld [vmem:[%s320 + $0x10] sm:$0xff]
        %v324 = vld [vmem:[%s320 + $0x18] sm:$0xff]
        %v325 = vld [vmem:[%s320 + $0x20] sm:$0xff]
        %v326 = vld [vmem:[%s320 + $0x28] sm:$0xff]
        %vm327 = vcmask 392192
        %v329 = vsel %vm327, %v317, 0
        %v332 = vsel %vm327, %v318, 0
        %334 = vmatprep.subr.mxu0 0.0
        %335 = vmatpush1.msra.mxu0 0.0
        %336 = vmatprep.subr.mxu0 0.0
        %337 = vmatpush1.msra.mxu0 0.0
        %338 = vmatprep.subr.mxu0 0.0
        %339 = vmatpush1.msra.mxu0 0.0
        %340 = vmatprep.subr.mxu0 0.0
        %341 = vmatpush1.msra.mxu0 0.0
        %342 = vmatprep.subr.mxu0 0.0
        %343 = vmatpush1.msra.mxu0 0.0
        %344 = vmatprep.subr.mxu0 0.0
        %345 = vmatpush1.msra.mxu0 0.0
        %346 = vmatprep.subr.mxu0 0.0
        %347 = vmatpush1.msra.mxu0 0.0
        %348 = vmatprep.subr.mxu0 0.0
        %349 = vmatpush1.msra.mxu0 0.0
        %350 = vmatprep.subr.mxu0 0.0
        %351 = vmatpush1.msra.mxu0 0.0
        %352 = vmatprep.subr.mxu0 0.0
        %353 = vmatpush1.msra.mxu0 0.0
        %354 = vmatprep.subr.mxu0 0.0
        %355 = vmatpush1.msra.mxu0 %v326
        %356 = vmatprep.subr.mxu0 0.0
        %357 = vmatpush1.msra.mxu0 %v325
        %358 = vmatprep.subr.mxu0 0.0
        %359 = vmatpush1.msra.mxu0 %v324
        %360 = vmatprep.subr.mxu0 0.0
        %361 = vmatpush1.msra.mxu0 %v323
        %362 = vmatprep.subr.mxu0 0.0
        %363 = vmatpush1.msra.mxu0 %v322
        %364 = vmatprep.subr.mxu0 0.0
        %365 = vmatpush1.msra.mxu0 %v321
        %366 = vmatprep.subr.mxu0 0.0
        %367 = vmatpush2.msra.mxu0 0.0
        %368 = vmatprep.subr.mxu0 0.0
        %369 = vmatpush2.msra.mxu0 0.0
        %370 = vmatprep.subr.mxu0 0.0
        %371 = vmatpush2.msra.mxu0 0.0
        %372 = vmatprep.subr.mxu0 0.0
        %373 = vmatpush2.msra.mxu0 0.0
        %374 = vmatprep.subr.mxu0 0.0
        %375 = vmatpush2.msra.mxu0 0.0
        %376 = vmatprep.subr.mxu0 0.0
        %377 = vmatpush2.msra.mxu0 0.0
        %378 = vmatprep.subr.mxu0 0.0
        %379 = vmatpush2.msra.mxu0 0.0
        %380 = vmatprep.subr.mxu0 0.0
        %381 = vmatpush2.msra.mxu0 0.0
        %382 = vmatprep.subr.mxu0 0.0
        %383 = vmatpush2.msra.mxu0 0.0
        %384 = vmatprep.subr.mxu0 0.0
        %385 = vmatpush2.msra.mxu0 0.0
        %386 = vmatprep.subr.mxu0 0.0
        %387 = vmatpush2.msra.mxu0 0.0
        %388 = vmatprep.subr.mxu0 0.0
        %389 = vmatpush2.msra.mxu0 0.0
        %390 = vmatprep.subr.mxu0 0.0
        %391 = vmatpush2.msra.mxu0 0.0
        %392 = vmatprep.subr.mxu0 0.0
        %393 = vmatpush2.msra.mxu0 0.0
        %394 = vmatprep.subr.mxu0 0.0
        %395 = vmatpush2.msra.mxu0 0.0
        %396 = vmatprep.subr.mxu0 0.0
        %397 = vmatpush2.msra.mxu0 0.0
        %398 = vmatprep.mubr.f32.mxu0 0.0
        %399 = vmatmul.mubr.f32.gmra.mxu0 %v329
        %v400 = vpop.f32.mrf.mxu0
        %v401 = vadd.f32 0.0, %v400
        %v402 = vpop.f32.mrf.mxu0
        %403 = vmatprep.mubr.f32.mxu0 0.0
        %404 = vmatmul.mubr.f32.gmra.mxu0 %v332
        %v405 = vpop.f32.mrf.mxu0
        %v406 = vadd.f32 0.0, %v405
        %v407 = vpop.f32.mrf.mxu0
        %408 = vdwg.mxu0
        %p409 = scmp.eq.s32.totalorder %s19, 0
        // Predicated region
        $region71: #{dis_conv_forward.1} parent=65 // pred_check
          %p410 = pneg %p409
        $region72: #{dis_conv_forward.1} parent=65 // pred_check_branch
          %412 = sbr.rel (%p410) target = $region74
        $region73: #{dis_conv_forward.1} parent=65 // pred_region
          %413 = vst.msk [vmem:[%s250] sm:$0xff] %vm304, %v401
          %414 = vst.msk [vmem:[%s250 + $0x8] sm:$0xff] %vm304, %v406
        $region74: #{dis_conv_forward.1} parent=65 // pred_fallthru
          _
        %p415 = scmp.gt.s32.totalorder %s19, 0
        // Predicated region
        $region75: #{dis_conv_forward.1} parent=65 // pred_check
          %p416 = pneg %p415
        $region76: #{dis_conv_forward.1} parent=65 // pred_check_branch
          %418 = sbr.rel (%p416) target = $region78
        $region77: #{dis_conv_forward.1} parent=65 // pred_region
          %v419 = vld [vmem:[%s250] sm:$0xff]
          %v420 = vld [vmem:[%s250 + $0x8] sm:$0xff]
          %v421 = vadd.f32 %v419, %v401
          %v422 = vadd.f32 %v420, %v406
          %423 = vst.msk [vmem:[%s250] sm:$0xff] %vm304, %v421
          %424 = vst.msk [vmem:[%s250 + $0x8] sm:$0xff] %vm304, %v422
        $region78: #{dis_conv_forward.1} parent=65 // pred_fallthru
          _
        %p425 = scmp.eq.s32.totalorder %s19, 2
        // Predicated region
        $region79: #{dis_conv_forward.1} parent=65 // pred_check
          %p426 = pneg %p425
        $region80: #{dis_conv_forward.1} parent=65 // pred_check_branch
          %428 = sbr.rel (%p426) target = $region82
        $region81: #{dis_conv_forward.1} parent=65 // pred_region
          %v429 = vld [vmem:[%s250] sm:$0xff]
          %v430 = vld [vmem:[%s250 + $0x8] sm:$0xff]
          %v431 = vld [vmem:[%s2] sm:$0x1]
          %v433 = vlaneseq
          %v434 = vshrl.u32 %v433, 7
          %v435 = vsub.s32 0, %v434
          %v436 = vrot.slane %v431, %v435
          %v438 = vadd.f32 %v429, %v436
          %v439 = vadd.f32 %v430, %v436
          %v440 = vmul.f32 %v438, 0.2
          %v441 = vmul.f32 %v439, 0.2
          %v442 = vmax.f32 %v438, %v440
          %v443 = vmax.f32 %v439, %v441
          %444 = vst.msk [vmem:[%s250] sm:$0xff] %vm304, %v442
          %445 = vst.msk [vmem:[%s250 + $0x8] sm:$0xff] %vm304, %v443
        $region82: #{dis_conv_forward.1} parent=65 // pred_fallthru
          _
        %p446 = scmp.lt.s32.totalorder %s18, 7
        %s447 = scalar_select %p446, %s18, 7
        %s448 = smul.addr %s447, 2
        %s449 = smul.addr %s448, 8
        %s450 = scalar_lea.vmem %s3, %s449
        // Predicated region
        $region83: #{dis_conv_forward.1} parent=65 // pred_check
          %p451 = pneg %p114
        $region84: #{dis_conv_forward.1} parent=65 // pred_check_branch
          %453 = sbr.rel (%p451) target = $region86
        $region85: #{dis_conv_forward.1} parent=65 // pred_region
          _
        $region86: #{dis_conv_forward.1} parent=65 // pred_fallthru
          _
      $region66: #{dis_conv_forward.1} parent=5 // pred_fallthru
        _
      %p454 = scmp.le.s32.totalorder 2, %s9
      // Predicated region
      $region87: #{dis_conv_forward.1} parent=5 // pred_check
        %p455 = pneg %p454
      $region88: #{dis_conv_forward.1} parent=5 // pred_check_branch
        %457 = sbr.rel (%p455) target = $region90
      $region89: #{dis_conv_forward.1} parent=5 // pred_region
        %s458 = ssub.s32 %s9, 2
        // Predicated region
        $region91: #{dis_conv_forward.1} parent=89 // pred_check
          %p459 = pneg %p120
        $region92: #{dis_conv_forward.1} parent=89 // pred_check_branch
          %461 = sbr.rel (%p459) target = $region94
        $region93: #{dis_conv_forward.1} parent=89 // pred_region
          %p462 = scmp.lt.s32.totalorder %s20, 7
          %s463 = scalar_select %p462, %s20, 7
          %s464 = smul.addr %s463, 2
          %s465 = smul.addr %s464, 8
          %s466 = scalar_lea.vmem %s3, %s465
        $region94: #{dis_conv_forward.1} parent=89 // pred_fallthru
          _
      $region90: #{dis_conv_forward.1} parent=5 // pred_fallthru
        _
    $region6: #{dis_conv_forward.1} parent=1 // loop_footer
      %s13 = sadd.s32 1, %s9
    $region7: #{dis_conv_forward.1} parent=1 // loop_footer_branch
      %8 = sbr.rel target = $region3
    $region8: #{dis_conv_forward.1} parent=1 // loop_exit
      _

</llo_original>
